<compile_context>
chip_gen: v6e
topology: v6e:2x2x1
jax: 0.10.0
libtpu: 0.0.40
codegen_flags: <defaults>
</compile_context>

<pallas_src>
import math
from functools import partial

import jax
import jax.numpy as jnp
from jax.experimental import pallas as pl
from jax.experimental.pallas import tpu as pltpu

_LANE = 128
_VMEM_CAP = 48 * 1024 * 1024   # headroom below v7x's 64 MiB physical VMEM


def _dot(a, b):
    """MXU matmul, f32 accumulate.  HIGHEST precision only on the f32 parity path."""
    prec = jax.lax.Precision.HIGHEST if a.dtype == jnp.float32 else None
    return jnp.dot(a, b, preferred_element_type=jnp.float32, precision=prec)


# ----------------------------- fused Pallas kernel -----------------------------

def _fused_debt_kernel(t_ref, x_ref, noise_ref, yemb_ref, freqs_ref,
                       w_in_ref, b_in_ref, w0c_ref, w0s_ref, b0_ref,
                       w2_ref, b2_ref, wout_ref, bout_ref,
                       tok_ref, xemb_ref, c_ref,
                       *, batch, compute_dtype):
    cd = compute_dtype

    # ---- input projection: x_emb = patchify(x_t) @ W_in + b_in --------------
    # Activations arrive f32 and are cast to the compute dtype on the VPU
    # inside the kernel (no separate wrapper-side cast / extra HBM copy).
    xemb_ref[...] = _dot(x_ref[...].astype(cd), w_in_ref[...]) + b_in_ref[...]

    # ---- conditioning: c = MLP(sinusoidal_embedding(t)) + y_emb -------------
    # t lives in SMEM; scalar * vreg multiplies keep the broadcast pure-VPU.
    freqs = freqs_ref[...]                                      # [1, half]
    args = jnp.concatenate(
        [t_ref[i] * freqs for i in range(batch)], axis=0)       # [B, half]
    cosp = jnp.cos(args).astype(cd)
    sinp = jnp.sin(args).astype(cd)
    # cat([cos, sin], -1) @ W0  ==  cos @ W0[:half] + sin @ W0[half:]
    h = _dot(cosp, w0c_ref[...]) + _dot(sinp, w0s_ref[...]) + b0_ref[...]
    h = h * jax.nn.sigmoid(h)                                   # SiLU (1st layer)
    c_ref[...] = _dot(h.astype(cd), w2_ref[...]) + b2_ref[...] + yemb_ref[...]

    # ---- output projection of the predicted embeddings ----------------------
    # TODO(synk): the EBTAdaLN transformer is undefined in the source, so the
    # MCMC refine loop is skipped and the initial random-noise prediction is
    # projected directly (x_emb / c above would feed that transformer).
    tok_ref[...] = _dot(noise_ref[...].astype(cd), wout_ref[...]) + bout_ref[...]


def fused_debt_forward(t, x_flat, noise, y_emb, freqs, w_in, b_in,
                       w0c, w0s, b0, w2, b2, w_out_pad, b_out_pad,
                       *, compute_dtype):
    """One pallas_call for the whole eval forward.  Returns (tokens_pad, x_emb, c)."""
    B = t.shape[0]
    M, _ = x_flat.shape
    D = w_in.shape[1]
    half = freqs.shape[0]
    n_pad = w_out_pad.shape[1]

    operands = (
        t.astype(jnp.float32),                      # -> SMEM
        x_flat, noise, y_emb,
        freqs.reshape(1, half),
        w_in, b_in.reshape(1, D),
        w0c, w0s, b0.reshape(1, D),
        w2, b2.reshape(1, D),
        w_out_pad, b_out_pad.reshape(1, n_pad),
    )
    out_shape = (
        jax.ShapeDtypeStruct((M, n_pad), jnp.float32),   # lane-dense padded tokens
        jax.ShapeDtypeStruct((M, D), jnp.float32),       # x_emb (transformer input)
        jax.ShapeDtypeStruct((B, D), jnp.float32),       # conditioning c
    )

    # VMEM budget from the actual operand/result bytes (x2 for double-buffered
    # windows) plus compiler-scratch headroom, clamped below 48 MiB so the same
    # call stays safe on v7x's 64 MiB VMEM as well as v5e/v6e's 128 MiB.
    nbytes = sum(math.prod(o.shape) * o.dtype.itemsize for o in operands)
    nbytes += sum(math.prod(s.shape) * jnp.dtype(s.dtype).itemsize for s in out_shape)
    vmem_limit = int(min(max(2 * nbytes + (4 << 20), 8 << 20), _VMEM_CAP))

    in_specs = (
        [pl.BlockSpec(memory_space=pltpu.MemorySpace.SMEM)]        # t
        + [pl.BlockSpec(memory_space=pltpu.MemorySpace.VMEM)] * (len(operands) - 1)
    )
    out_specs = tuple(
        pl.BlockSpec(memory_space=pltpu.MemorySpace.VMEM) for _ in out_shape)

    # Single kernel invocation: every matmul here is dispatch/DMA bound
    # (M = B*L rows, K <= 128), so tiling would only add ~0.35us/step pipeline
    # overhead.  If B*L grows large, split the row-wise projections over a
    # "parallel" M grid axis (2 TensorCores on v7x) and re-derive the VMEM budget.
    return pl.pallas_call(
        partial(_fused_debt_kernel, batch=B, compute_dtype=compute_dtype),
        out_shape=out_shape,
        in_specs=in_specs,
        out_specs=out_specs,
        compiler_params=pltpu.CompilerParams(vmem_limit_bytes=vmem_limit),
    )(*operands)


# ------------------------------ DEBT wrapper -------------------------------

class DEBTPallas:
    def __init__(
        self,
        key,
        img_size=64,
        vae_stride=16,
        patch_size=1,
        embed_dim=128,
        class_num=10,
        frequency_embedding_size=64,
        denoising_initial_condition="random_noise",
        use_bf16=True,
    ):
        assert frequency_embedding_size % 2 == 0, "fused cond kernel assumes even dim"
        self.img_size = img_size
        self.vae_stride = vae_stride
        self.vae_embed_dim = 16
        self.patch_size = patch_size
        self.seq_h = self.seq_w = img_size // vae_stride // patch_size
        self.seq_len = self.seq_h * self.seq_w
        self.token_embed_dim = 16 * patch_size ** 2
        self.embed_dim = embed_dim
        self.freq_dim = frequency_embedding_size
        self.class_num = class_num
        self.denoising_initial_condition = denoising_initial_condition

        ks = jax.random.split(key, 8)
        D, F, T = embed_dim, frequency_embedding_size, self.token_embed_dim

        # --- master parameters (f32, init matching the PyTorch reference) ---
        # TimestepEmbedder MLP (stored [in, out] since kernels compute x @ w)
        self.t_w0 = 0.02 * jax.random.normal(ks[0], (F, D), jnp.float32)
        self.t_b0 = jnp.zeros((D,), jnp.float32)
        self.t_w2 = 0.02 * jax.random.normal(ks[1], (D, D), jnp.float32)
        self.t_b2 = jnp.zeros((D,), jnp.float32)
        # class embedding table (class_num + 1 rows, std=0.02)
        self.y_embed = 0.02 * jax.random.normal(ks[2], (class_num + 1, D), jnp.float32)
        # positional embedding (std=0.02) -- only consumed by the (missing) transformer
        self.pos_embed = 0.02 * jax.random.normal(
            ks[3], (1, 2 * self.seq_len, D), jnp.float32
        )
        # input / output projections (xavier uniform, zero bias)
        lim_in = math.sqrt(6.0 / (T + D))
        self.w_in = jax.random.uniform(ks[4], (T, D), jnp.float32, -lim_in, lim_in)
        self.b_in = jnp.zeros((D,), jnp.float32)
        lim_out = math.sqrt(6.0 / (D + T))
        self.w_out = jax.random.uniform(ks[5], (D, T), jnp.float32, -lim_out, lim_out)
        self.b_out = jnp.zeros((T,), jnp.float32)

        # --- compute-dtype copies (bf16 matmul weights; biases stay f32) ---
        cd = jnp.bfloat16 if use_bf16 else jnp.float32
        self.compute_dtype = cd
        half = F // 2
        self.freqs = jnp.exp(
            -math.log(10000.0) * jnp.arange(half, dtype=jnp.float32) / half
        )
        self.w_in_c = self.w_in.astype(cd)
        self.t_w0_cos = self.t_w0[:half].astype(cd)    # rows hit by cos(args)
        self.t_w0_sin = self.t_w0[half:].astype(cd)    # rows hit by sin(args)
        self.t_w2_c = self.t_w2.astype(cd)
        # Lane-dense output projection: zero-pad 16 -> 128 output columns so the
        # kernel emits unmasked full-lane stores; wrapper slices back to T.
        n_pad = ((T + _LANE - 1) // _LANE) * _LANE
        self.out_n_pad = n_pad
        self.w_out_c = jnp.pad(self.w_out, ((0, 0), (0, n_pad - T))).astype(cd)
        self.b_out_pad = jnp.pad(self.b_out, (0, n_pad - T))

        # jit the forward: fuses / DCEs all wrapper glue around the single
        # pallas_call (captured parameter arrays become trace-time constants).
        self._forward_jit = jax.jit(self._forward_impl)

    # --- patchify / unpatchify (reshape glue, matches the torch einsums) ---
    def patchify(self, x):
        B, C, H, W = x.shape
        p = self.patch_size
        h_, w_ = H // p, W // p
        x = x.reshape(B, C, h_, p, w_, p)
        x = jnp.einsum("nchpwq->nhwcpq", x)
        return x.reshape(B, h_ * w_, C * p * p)

    def unpatchify(self, x):
        B = x.shape[0]
        p = self.patch_size
        c = self.vae_embed_dim
        h_, w_ = self.seq_h, self.seq_w
        x = x.reshape(B, h_, w_, c, p, p)
        x = jnp.einsum("nhwcpq->nchpwq", x)
        return x.reshape(B, c, h_ * p, w_ * p)

    # --- eval-mode _forward_impl (traced under jit) ---
    def _forward_impl(self, x_t, t, labels, noise_key):
        B = x_t.shape[0]
        D, L, T = self.embed_dim, self.seq_len, self.token_embed_dim

        x_flat = self.patchify(x_t).reshape(B * L, T)          # f32; cast in-kernel
        y_emb = jnp.take(self.y_embed, labels, axis=0)         # [B, D] class embed

        # eval path: real embeddings are zeros; initial prediction is random noise
        assert self.denoising_initial_condition == "random_noise"
        noise = jax.random.normal(noise_key, (B * L, D), jnp.float32)

        tokens_pad, x_emb, c = fused_debt_forward(
            t, x_flat, noise, y_emb, self.freqs,
            self.w_in_c, self.b_in,
            self.t_w0_cos, self.t_w0_sin, self.t_b0,
            self.t_w2_c, self.t_b2,
            self.w_out_c, self.b_out_pad,
            compute_dtype=self.compute_dtype,
        )
        # TODO(synk): x_emb, c and pos_embed would feed the EBTAdaLN transformer
        # inside the MCMC refine loop; that module is undefined in the source.
        del x_emb, c

        tokens = tokens_pad[:, :T].reshape(B, L, T)   # pad-slice fuses under jit
        return self.unpatchify(tokens)

    def forward_impl(self, x_t, t, labels, noise_key):
        return self._forward_jit(x_t, t, labels, noise_key)


# ---------------------------------- main -----------------------------------

if __name__ == "__main__":
    key = jax.random.PRNGKey(0)
    k_model, k_x, k_t, k_lbl, k_noise = jax.random.split(key, 5)

    model = DEBTPallas(
        k_model,
        img_size=64,        # -> seq_h = seq_w = 4, seq_len = 16
        vae_stride=16,
        patch_size=1,
        embed_dim=128,
        class_num=10,
        frequency_embedding_size=64,
    )

    B = 2
    x_t = jax.random.normal(k_x, (B, 16, 4, 4), jnp.float32)      # [B, C, H, W]
    t = jax.random.randint(k_t, (B,), 0, 1000)                    # timesteps
    labels = jax.random.randint(k_lbl, (B,), 0, model.class_num)  # class labels

    out = model.forward_impl(x_t, t, labels, k_noise)
    out = jax.block_until_ready(out)
    assert out.shape == (B, 16, 4, 4), out.shape
    print("KERNEL_OK")
</pallas_src>

<mosaic_0001>
module attributes {stable_mosaic.version = 11 : i64} {
  func.func @_fused_debt_kernel(%arg0: memref<2xf32, #tpu.memory_space<smem>>, %arg1: memref<32x16xf32, #tpu.memory_space<vmem>>, %arg2: memref<32x128xf32, #tpu.memory_space<vmem>>, %arg3: memref<2x128xf32, #tpu.memory_space<vmem>>, %arg4: memref<1x32xf32, #tpu.memory_space<vmem>>, %arg5: memref<16x128xbf16, #tpu.memory_space<vmem>>, %arg6: memref<1x128xf32, #tpu.memory_space<vmem>>, %arg7: memref<32x128xbf16, #tpu.memory_space<vmem>>, %arg8: memref<32x128xbf16, #tpu.memory_space<vmem>>, %arg9: memref<1x128xf32, #tpu.memory_space<vmem>>, %arg10: memref<128x128xbf16, #tpu.memory_space<vmem>>, %arg11: memref<1x128xf32, #tpu.memory_space<vmem>>, %arg12: memref<128x128xbf16, #tpu.memory_space<vmem>>, %arg13: memref<1x128xf32, #tpu.memory_space<vmem>>, %arg14: memref<32x128xf32, #tpu.memory_space<vmem>>, %arg15: memref<32x128xf32, #tpu.memory_space<vmem>>, %arg16: memref<2x128xf32, #tpu.memory_space<vmem>>) attributes {dimension_semantics = [], scalar_prefetch = 0 : i64, scratch_operands = 0 : i64, tpu.core_type = #tpu.core_type<tc>} {
    %c0 = arith.constant 0 : index
    %c0_0 = arith.constant 0 : index
    %0 = vector.load %arg1[%c0, %c0_0] : memref<32x16xf32, #tpu.memory_space<vmem>>, vector<32x16xf32>
    %1 = arith.truncf %0 : vector<32x16xf32> to vector<32x16xbf16>
    %c0_1 = arith.constant 0 : index
    %c0_2 = arith.constant 0 : index
    %2 = vector.load %arg5[%c0_1, %c0_2] : memref<16x128xbf16, #tpu.memory_space<vmem>>, vector<16x128xbf16>
    %cst = arith.constant dense<0.000000e+00> : vector<32x128xf32>
    %3 = tpu.matmul %1, %2, %cst {dimension_numbers = #tpu.dot_dimension_numbers<[1], [0], [0], [1], [0, 0, 1, 1], [], []>} : vector<32x16xbf16>, vector<16x128xbf16>, vector<32x128xf32> -> vector<32x128xf32>
    %c0_3 = arith.constant 0 : index
    %c0_4 = arith.constant 0 : index
    %4 = vector.load %arg6[%c0_3, %c0_4] : memref<1x128xf32, #tpu.memory_space<vmem>>, vector<1x128xf32>
    %5 = vector.broadcast %4 : vector<1x128xf32> to vector<32x128xf32>
    %6 = arith.addf %3, %5 : vector<32x128xf32>
    %c0_5 = arith.constant 0 : index
    %c0_6 = arith.constant 0 : index
    %7 = vector.load %arg15[%c0_5, %c0_6] : memref<32x128xf32, #tpu.memory_space<vmem>>, vector<32x128xf32>
    tpu.vector_store %arg15[%c0_5, %c0_6], %6 {strides = array<i32>} : memref<32x128xf32, #tpu.memory_space<vmem>>, vector<32x128xf32>,
    %c0_7 = arith.constant 0 : index
    %c0_8 = arith.constant 0 : index
    %8 = vector.load %arg4[%c0_7, %c0_8] : memref<1x32xf32, #tpu.memory_space<vmem>>, vector<1x32xf32>
    %c0_9 = arith.constant 0 : index
    %9 = memref.load %arg0[%c0_9] : memref<2xf32, #tpu.memory_space<smem>>
    %10 = vector.broadcast %9 : f32 to vector<1x32xf32>
    %11 = arith.mulf %10, %8 : vector<1x32xf32>
    %c1 = arith.constant 1 : index
    %12 = memref.load %arg0[%c1] : memref<2xf32, #tpu.memory_space<smem>>
    %13 = vector.broadcast %12 : f32 to vector<1x32xf32>
    %14 = arith.mulf %13, %8 : vector<1x32xf32>
    %15 = tpu.concatenate %11, %14 in 0 : vector<1x32xf32>, vector<1x32xf32> -> vector<2x32xf32>
    %16 = math.cos %15 : vector<2x32xf32>
    %17 = arith.truncf %16 : vector<2x32xf32> to vector<2x32xbf16>
    %18 = math.sin %15 : vector<2x32xf32>
    %19 = arith.truncf %18 : vector<2x32xf32> to vector<2x32xbf16>
    %c0_10 = arith.constant 0 : index
    %c0_11 = arith.constant 0 : index
    %20 = vector.load %arg7[%c0_10, %c0_11] : memref<32x128xbf16, #tpu.memory_space<vmem>>, vector<32x128xbf16>
    %cst_12 = arith.constant dense<0.000000e+00> : vector<2x128xf32>
    %21 = tpu.matmul %17, %20, %cst_12 {dimension_numbers = #tpu.dot_dimension_numbers<[1], [0], [0], [1], [0, 0, 1, 1], [], []>} : vector<2x32xbf16>, vector<32x128xbf16>, vector<2x128xf32> -> vector<2x128xf32>
    %c0_13 = arith.constant 0 : index
    %c0_14 = arith.constant 0 : index
    %22 = vector.load %arg8[%c0_13, %c0_14] : memref<32x128xbf16, #tpu.memory_space<vmem>>, vector<32x128xbf16>
    %cst_15 = arith.constant dense<0.000000e+00> : vector<2x128xf32>
    %23 = tpu.matmul %19, %22, %cst_15 {dimension_numbers = #tpu.dot_dimension_numbers<[1], [0], [0], [1], [0, 0, 1, 1], [], []>} : vector<2x32xbf16>, vector<32x128xbf16>, vector<2x128xf32> -> vector<2x128xf32>
    %24 = arith.addf %21, %23 : vector<2x128xf32>
    %c0_16 = arith.constant 0 : index
    %c0_17 = arith.constant 0 : index
    %25 = vector.load %arg9[%c0_16, %c0_17] : memref<1x128xf32, #tpu.memory_space<vmem>>, vector<1x128xf32>
    %26 = vector.broadcast %25 : vector<1x128xf32> to vector<2x128xf32>
    %27 = arith.addf %24, %26 : vector<2x128xf32>
    %28 = arith.negf %27 : vector<2x128xf32>
    %29 = math.exp %28 : vector<2x128xf32>
    %cst_18 = arith.constant 1.000000e+00 : f32
    %30 = vector.broadcast %cst_18 : f32 to vector<2x128xf32>
    %31 = arith.addf %30, %29 : vector<2x128xf32>
    %32 = arith.divf %30, %31 : vector<2x128xf32>
    %33 = arith.mulf %27, %32 : vector<2x128xf32>
    %34 = arith.truncf %33 : vector<2x128xf32> to vector<2x128xbf16>
    %c0_19 = arith.constant 0 : index
    %c0_20 = arith.constant 0 : index
    %35 = vector.load %arg10[%c0_19, %c0_20] : memref<128x128xbf16, #tpu.memory_space<vmem>>, vector<128x128xbf16>
    %cst_21 = arith.constant dense<0.000000e+00> : vector<2x128xf32>
    %36 = tpu.matmul %34, %35, %cst_21 {dimension_numbers = #tpu.dot_dimension_numbers<[1], [0], [0], [1], [0, 0, 1, 1], [], []>} : vector<2x128xbf16>, vector<128x128xbf16>, vector<2x128xf32> -> vector<2x128xf32>
    %c0_22 = arith.constant 0 : index
    %c0_23 = arith.constant 0 : index
    %37 = vector.load %arg11[%c0_22, %c0_23] : memref<1x128xf32, #tpu.memory_space<vmem>>, vector<1x128xf32>
    %38 = vector.broadcast %37 : vector<1x128xf32> to vector<2x128xf32>
    %39 = arith.addf %36, %38 : vector<2x128xf32>
    %c0_24 = arith.constant 0 : index
    %c0_25 = arith.constant 0 : index
    %40 = vector.load %arg3[%c0_24, %c0_25] : memref<2x128xf32, #tpu.memory_space<vmem>>, vector<2x128xf32>
    %41 = arith.addf %39, %40 : vector<2x128xf32>
    %c0_26 = arith.constant 0 : index
    %c0_27 = arith.constant 0 : index
    %42 = vector.load %arg16[%c0_26, %c0_27] : memref<2x128xf32, #tpu.memory_space<vmem>>, vector<2x128xf32>
    tpu.vector_store %arg16[%c0_26, %c0_27], %41 {strides = array<i32>} : memref<2x128xf32, #tpu.memory_space<vmem>>, vector<2x128xf32>,
    %c0_28 = arith.constant 0 : index
    %c0_29 = arith.constant 0 : index
    %43 = vector.load %arg2[%c0_28, %c0_29] : memref<32x128xf32, #tpu.memory_space<vmem>>, vector<32x128xf32>
    %44 = arith.truncf %43 : vector<32x128xf32> to vector<32x128xbf16>
    %c0_30 = arith.constant 0 : index
    %c0_31 = arith.constant 0 : index
    %45 = vector.load %arg12[%c0_30, %c0_31] : memref<128x128xbf16, #tpu.memory_space<vmem>>, vector<128x128xbf16>
    %cst_32 = arith.constant dense<0.000000e+00> : vector<32x128xf32>
    %46 = tpu.matmul %44, %45, %cst_32 {dimension_numbers = #tpu.dot_dimension_numbers<[1], [0], [0], [1], [0, 0, 1, 1], [], []>} : vector<32x128xbf16>, vector<128x128xbf16>, vector<32x128xf32> -> vector<32x128xf32>
    %c0_33 = arith.constant 0 : index
    %c0_34 = arith.constant 0 : index
    %47 = vector.load %arg13[%c0_33, %c0_34] : memref<1x128xf32, #tpu.memory_space<vmem>>, vector<1x128xf32>
    %48 = vector.broadcast %47 : vector<1x128xf32> to vector<32x128xf32>
    %49 = arith.addf %46, %48 : vector<32x128xf32>
    %c0_35 = arith.constant 0 : index
    %c0_36 = arith.constant 0 : index
    %50 = vector.load %arg14[%c0_35, %c0_36] : memref<32x128xf32, #tpu.memory_space<vmem>>, vector<32x128xf32>
    tpu.vector_store %arg14[%c0_35, %c0_36], %49 {strides = array<i32>} : memref<32x128xf32, #tpu.memory_space<vmem>>, vector<32x128xf32>,
    return
  }
}

</mosaic_0001>

<llo_original>
// kernel: _forward_impl.1
$region0: #{_forward_impl.1}
  #allocation0 [shape = 'u32[]', space=smem, size = 0x4, offset = 0x4, fixed_abs, tag = 'smem constant byte address 0x4 - core index']
  #allocation1 [shape = 'u32[144,128]{1,0:T(1,128)}', space=vmem, size = 0x12000, scoped, tag = 'internal scratch']
  %s0 = inlined_call_operand.vmem [shape: f32[2], index: 0, kind: input, shape index: {}]
  %s1 = inlined_call_operand.vmem [shape: f32[32,16], index: 1, kind: input, shape index: {}]
  %s2 = inlined_call_operand.vmem [shape: f32[32,128], index: 2, kind: input, shape index: {}]
  %s3 = inlined_call_operand.vmem [shape: f32[2,128], index: 3, kind: input, shape index: {}]
  %s4 = inlined_call_operand.vmem [shape: f32[1,32], index: 4, kind: input, shape index: {}]
  %s5 = inlined_call_operand.vmem [shape: bf16[16,128], index: 5, kind: input, shape index: {}]
  %s6 = inlined_call_operand.vmem [shape: f32[1,128], index: 6, kind: input, shape index: {}, may-alias: {6,9,11,13}]
  %s7 = inlined_call_operand.hbm [shape: bf16[32,128], index: 7, kind: input, shape index: {}]
  %s8 = inlined_call_operand.hbm [shape: bf16[32,128], index: 8, kind: input, shape index: {}]
  %s9 = inlined_call_operand.vmem [shape: f32[1,128], index: 9, kind: input, shape index: {}, may-alias: {6,9,11,13}]
  %s10 = inlined_call_operand.hbm [shape: bf16[128,128], index: 10, kind: input, shape index: {}]
  %s11 = inlined_call_operand.vmem [shape: f32[1,128], index: 11, kind: input, shape index: {}, may-alias: {6,9,11,13}]
  %s12 = inlined_call_operand.vmem [shape: bf16[128,128], index: 12, kind: input, shape index: {}]
  %s13 = inlined_call_operand.vmem [shape: f32[1,128], index: 13, kind: input, shape index: {}, may-alias: {6,9,11,13}]
  %s14 = inlined_call_operand.hbm [shape: f32[32,128], index: 14, kind: output, shape index: {0}]
  %s15 = inlined_call_operand.hbm [shape: f32[32,128], index: 15, kind: output, shape index: {1}]
  %s16 = inlined_call_operand.hbm [shape: f32[2,128], index: 16, kind: output, shape index: {2}]
  %17 = xla_tuple %s14, %s15, %s16
  %s18 = sld [smem:[#allocation0]]
  $region98: #{_forward_impl.1} parent=0
    _
  %s20 = ssub.s32 1, %s18
  %s21 = scalar_select 0, %s20, %s18
  $region1: #{_forward_impl.1} parent=0
    #allocation2 [shape = 'u8[512]{0}', space=smem, size = 0x200, scoped, tag = 'input window, operand 0, single buffered']
    #allocation3 [shape = 's32[1]{0}', space=sflag, size = 0x4, scoped, tag = 'scoped memory for _forward_impl.1']
    #allocation4 [shape = 's32[1]{0}', space=sflag, size = 0x4, scoped, tag = 'scoped memory for _forward_impl.1']
    #allocation5 [shape = 's32[1]{0}', space=sflag, size = 0x4, scoped, tag = 'scoped memory for _forward_impl.1']
    #allocation6 [shape = 'u8[8192]{0}', space=vmem, size = 0x2000, scoped, tag = 'input window, operand 7, single buffered']
    #allocation7 [shape = 'u8[8192]{0}', space=vmem, size = 0x2000, scoped, tag = 'input window, operand 8, single buffered']
    #allocation8 [shape = 's32[1]{0}', space=sflag, size = 0x4, scoped, tag = 'scoped memory for _forward_impl.1']
    #allocation9 [shape = 'u8[32768]{0}', space=vmem, size = 0x8000, scoped, tag = 'input window, operand 10, single buffered']
    #allocation10 [shape = 'u8[16384]{0}', space=vmem, size = 0x4000, scoped, tag = 'output window, operand 0, single buffered']
    #allocation11 [shape = 'u8[16384]{0}', space=vmem, size = 0x4000, scoped, tag = 'output window, operand 1, single buffered']
    #allocation12 [shape = 's32[1]{0}', space=sflag, size = 0x4, scoped, tag = 'scoped memory for _forward_impl.1']
    #allocation13 [shape = 'u8[1024]{0}', space=vmem, size = 0x400, scoped, tag = 'output window, operand 2, single buffered']
    %22 = vsyncpa [#allocation5], 0
    %23 = vsyncpa [#allocation3], 0
    %24 = vsyncpa [#allocation8], 0
    %25 = vsyncpa [#allocation4], 0
    %26 = vsyncpa [#allocation12], 0
    // Predicated region
    $region2: #{_forward_impl.1} parent=1 // pred_check
      _
    $region3: #{_forward_impl.1} parent=1 // pred_check_branch
      %28 = sbr.rel (0) target = $region5
    $region4: #{_forward_impl.1} parent=1 // pred_region
      %s30 = ssub.s32 16, 16
      %31 = vsyncadd [#allocation5], %s30
      %s33 = sshll.u32 %s0, 4
      %s34 = int_to_ptr.vmem [resolvable:$true] %s33
      %36 = dma.vmem_to_smem %s34, 16, [#allocation2], [#allocation5]
    $region5: #{_forward_impl.1} parent=1 // pred_fallthru
      _
    // Predicated region
    $region6: #{_forward_impl.1} parent=1 // pred_check
      _
    $region7: #{_forward_impl.1} parent=1 // pred_check_branch
      %38 = sbr.rel (0) target = $region9
    $region8: #{_forward_impl.1} parent=1 // pred_region
      _
    $region9: #{_forward_impl.1} parent=1 // pred_fallthru
      _
    // Predicated region
    $region10: #{_forward_impl.1} parent=1 // pred_check
      _
    $region11: #{_forward_impl.1} parent=1 // pred_check_branch
      %40 = sbr.rel (0) target = $region13
    $region12: #{_forward_impl.1} parent=1 // pred_region
      _
    $region13: #{_forward_impl.1} parent=1 // pred_fallthru
      _
    // Predicated region
    $region14: #{_forward_impl.1} parent=1 // pred_check
      _
    $region15: #{_forward_impl.1} parent=1 // pred_check_branch
      %42 = sbr.rel (0) target = $region17
    $region16: #{_forward_impl.1} parent=1 // pred_region
      _
    $region17: #{_forward_impl.1} parent=1 // pred_fallthru
      _
    // Predicated region
    $region18: #{_forward_impl.1} parent=1 // pred_check
      _
    $region19: #{_forward_impl.1} parent=1 // pred_check_branch
      %44 = sbr.rel (0) target = $region21
    $region20: #{_forward_impl.1} parent=1 // pred_region
      _
    $region21: #{_forward_impl.1} parent=1 // pred_fallthru
      _
    // Predicated region
    $region22: #{_forward_impl.1} parent=1 // pred_check
      _
    $region23: #{_forward_impl.1} parent=1 // pred_check_branch
      %46 = sbr.rel (0) target = $region25
    $region24: #{_forward_impl.1} parent=1 // pred_region
      _
    $region25: #{_forward_impl.1} parent=1 // pred_fallthru
      _
    // Predicated region
    $region26: #{_forward_impl.1} parent=1 // pred_check
      _
    $region27: #{_forward_impl.1} parent=1 // pred_check_branch
      %48 = sbr.rel (0) target = $region29
    $region28: #{_forward_impl.1} parent=1 // pred_region
      _
    $region29: #{_forward_impl.1} parent=1 // pred_fallthru
      _
    // Predicated region
    $region30: #{_forward_impl.1} parent=1 // pred_check
      _
    $region31: #{_forward_impl.1} parent=1 // pred_check_branch
      %50 = sbr.rel (0) target = $region33
    $region32: #{_forward_impl.1} parent=1 // pred_region
      %s52 = ssub.s32 256, 256
      %53 = vsyncadd [#allocation3], %s52
      %s54 = sshll.u32 [#allocation6], 4
      %s55 = int_to_ptr.vmem [resolvable:$true] %s54
      %60 = dma.hbm_to_vmem [thread:$0]  %s7, 256, %s55, [#allocation3], 64, 64, 4
    $region33: #{_forward_impl.1} parent=1 // pred_fallthru
      _
    // Predicated region
    $region34: #{_forward_impl.1} parent=1 // pred_check
      _
    $region35: #{_forward_impl.1} parent=1 // pred_check_branch
      %62 = sbr.rel (0) target = $region37
    $region36: #{_forward_impl.1} parent=1 // pred_region
      %s64 = ssub.s32 256, 256
      %65 = vsyncadd [#allocation8], %s64
      %s66 = sshll.u32 [#allocation7], 4
      %s67 = int_to_ptr.vmem [resolvable:$true] %s66
      %72 = dma.hbm_to_vmem [thread:$0]  %s8, 256, %s67, [#allocation8], 64, 64, 4
    $region37: #{_forward_impl.1} parent=1 // pred_fallthru
      _
    // Predicated region
    $region38: #{_forward_impl.1} parent=1 // pred_check
      _
    $region39: #{_forward_impl.1} parent=1 // pred_check_branch
      %74 = sbr.rel (0) target = $region41
    $region40: #{_forward_impl.1} parent=1 // pred_region
      _
    $region41: #{_forward_impl.1} parent=1 // pred_fallthru
      _
    // Predicated region
    $region42: #{_forward_impl.1} parent=1 // pred_check
      _
    $region43: #{_forward_impl.1} parent=1 // pred_check_branch
      %76 = sbr.rel (0) target = $region45
    $region44: #{_forward_impl.1} parent=1 // pred_region
      %s78 = ssub.s32 1024, 1024
      %79 = vsyncadd [#allocation8], %s78
      %s80 = sshll.u32 [#allocation9], 4
      %s81 = int_to_ptr.vmem [resolvable:$true] %s80
      %86 = dma.hbm_to_vmem [thread:$0]  %s10, 1024, %s81, [#allocation8], 64, 64, 4
    $region45: #{_forward_impl.1} parent=1 // pred_fallthru
      _
    // Predicated region
    $region46: #{_forward_impl.1} parent=1 // pred_check
      _
    $region47: #{_forward_impl.1} parent=1 // pred_check_branch
      %88 = sbr.rel (0) target = $region49
    $region48: #{_forward_impl.1} parent=1 // pred_region
      _
    $region49: #{_forward_impl.1} parent=1 // pred_fallthru
      _
    // Predicated region
    $region50: #{_forward_impl.1} parent=1 // pred_check
      _
    $region51: #{_forward_impl.1} parent=1 // pred_check_branch
      %90 = sbr.rel (0) target = $region53
    $region52: #{_forward_impl.1} parent=1 // pred_region
      _
    $region53: #{_forward_impl.1} parent=1 // pred_fallthru
      _
    // Predicated region
    $region54: #{_forward_impl.1} parent=1 // pred_check
      _
    $region55: #{_forward_impl.1} parent=1 // pred_check_branch
      %92 = sbr.rel (0) target = $region57
    $region56: #{_forward_impl.1} parent=1 // pred_region
      _
    $region57: #{_forward_impl.1} parent=1 // pred_fallthru
      _
    // Predicated region
    $region58: #{_forward_impl.1} parent=1 // pred_check
      _
    $region59: #{_forward_impl.1} parent=1 // pred_check_branch
      %94 = sbr.rel (0) target = $region61
    $region60: #{_forward_impl.1} parent=1 // pred_region
      %95 = dma.done [#allocation5], 16
    $region61: #{_forward_impl.1} parent=1 // pred_fallthru
      _
    // Predicated region
    $region62: #{_forward_impl.1} parent=1 // pred_check
      _
    $region63: #{_forward_impl.1} parent=1 // pred_check_branch
      %97 = sbr.rel (0) target = $region65
    $region64: #{_forward_impl.1} parent=1 // pred_region
      %98 = dma.done [#allocation3], 256
    $region65: #{_forward_impl.1} parent=1 // pred_fallthru
      _
    // Predicated region
    $region66: #{_forward_impl.1} parent=1 // pred_check
      _
    $region67: #{_forward_impl.1} parent=1 // pred_check_branch
      %100 = sbr.rel (0) target = $region69
    $region68: #{_forward_impl.1} parent=1 // pred_region
      %101 = dma.done [#allocation8], 256
    $region69: #{_forward_impl.1} parent=1 // pred_fallthru
      _
    // Predicated region
    $region70: #{_forward_impl.1} parent=1 // pred_check
      _
    $region71: #{_forward_impl.1} parent=1 // pred_check_branch
      %103 = sbr.rel (0) target = $region73
    $region72: #{_forward_impl.1} parent=1 // pred_region
      %104 = dma.done [#allocation8], 1024
    $region73: #{_forward_impl.1} parent=1 // pred_fallthru
      _
    %105 = sfence
    %v107 = vld [vmem:[%s1] sm:$0xff]
    %v108 = vld [vmem:[%s1 + $0x8] sm:$0xff]
    %v109 = vld [vmem:[%s1 + $0x10] sm:$0xff]
    %v110 = vld [vmem:[%s1 + $0x18] sm:$0xff]
    %v111 = vpack.c.bf16 %v108, %v107
    %v112 = vpack.c.bf16 %v110, %v109
    %v113 = vld [vmem:[%s5] sm:$0xf]
    %v114 = vld [vmem:[%s5 + $0x4] sm:$0xf]
    %v115 = vld [vmem:[%s6] sm:$0x1]
    %v117 = vlaneseq
    %v118 = vshrl.u32 %v117, 7
    %v119 = vsub.s32 0, %v118
    %v120 = vrot.slane %v115, %v119
    %v124 = vunpack.c.l.b16 %v113
    %v125 = vunpack.c.l.b16 %v114
    %v126 = vpack.c.b16 %v125, %v124
    %vm128 = vcmask 130048
    %v130 = vsel %vm128, %v111, 0
    %v133 = vsel %vm128, %v112, 0
    %135 = vmatprep.subr.bf16.mxu0 0
    %136 = vmatpush1.bf16.msra.mxu0 0
    %137 = vmatprep.subr.bf16.mxu0 0
    %138 = vmatpush1.bf16.msra.mxu0 0
    %139 = vmatprep.subr.bf16.mxu0 0
    %140 = vmatpush1.bf16.msra.mxu0 0
    %141 = vmatprep.subr.bf16.mxu0 0
    %142 = vmatpush1.bf16.msra.mxu0 0
    %143 = vmatprep.subr.bf16.mxu0 0
    %144 = vmatpush1.bf16.msra.mxu0 0
    %145 = vmatprep.subr.bf16.mxu0 0
    %146 = vmatpush1.bf16.msra.mxu0 0
    %147 = vmatprep.subr.bf16.mxu0 0
    %148 = vmatpush1.bf16.msra.mxu0 0
    %149 = vmatprep.subr.bf16.mxu0 0
    %150 = vmatpush1.bf16.msra.mxu0 %v126
    %151 = vmatprep.subr.bf16.mxu0 0
    %152 = vmatpush2.bf16.msra.mxu0 0
    %153 = vmatprep.subr.bf16.mxu0 0
    %154 = vmatpush2.bf16.msra.mxu0 0
    %155 = vmatprep.subr.bf16.mxu0 0
    %156 = vmatpush2.bf16.msra.mxu0 0
    %157 = vmatprep.subr.bf16.mxu0 0
    %158 = vmatpush2.bf16.msra.mxu0 0
    %159 = vmatprep.subr.bf16.mxu0 0
    %160 = vmatpush2.bf16.msra.mxu0 0
    %161 = vmatprep.subr.bf16.mxu0 0
    %162 = vmatpush2.bf16.msra.mxu0 0
    %163 = vmatprep.subr.bf16.mxu0 0
    %164 = vmatpush2.bf16.msra.mxu0 0
    %165 = vmatprep.subr.bf16.mxu0 0
    %166 = vmatpush2.bf16.msra.mxu0 0
    %167 = vmatprep.mubr.bf16.mxu0 0
    %168 = vmatmul.mubr.bf16.gmra.mxu0 %v130
    %v169 = vpop.f32.mrf.mxu0
    %v170 = vadd.f32 %v120, %v169
    %v171 = vpop.f32.mrf.mxu0
    %v172 = vpop.f32.mrf.mxu0
    %v173 = vadd.f32 %v120, %v172
    %v174 = vpop.f32.mrf.mxu0
    %175 = vmatprep.mubr.bf16.mxu0 0
    %176 = vmatmul.mubr.bf16.gmra.mxu0 %v133
    %v177 = vpop.f32.mrf.mxu0
    %v178 = vadd.f32 %v120, %v177
    %v179 = vpop.f32.mrf.mxu0
    %v180 = vpop.f32.mrf.mxu0
    %v181 = vadd.f32 %v120, %v180
    %v182 = vpop.f32.mrf.mxu0
    %183 = vdwg.mxu0
    %184 = vst [vmem:[#allocation11] sm:$0xff] %v170
    %185 = vst [vmem:[#allocation11 + $0x8] sm:$0xff] %v173
    %186 = vst [vmem:[#allocation11 + $0x10] sm:$0xff] %v178
    %187 = vst [vmem:[#allocation11 + $0x18] sm:$0xff] %v181
    %v188 = vld [vmem:[%s4] sm:$0x1]
    %s189 = sld [smem:[#allocation2]]
    %v190 = vstv %s189
    %v191 = vmul.f32 %v190, %v188
    %s192 = sld [smem:[#allocation2 + $0x1]]
    %v193 = vstv %s192
    %v194 = vmul.f32 %v193, %v188
    %v196 = vlaneseq
    %v197 = vshrl.u32 %v196, 7
    %v198 = vsub.s32 0, %v197
    %v199 = vrot.slane %v194, %v198
    %vm201 = vcmask 1040384
    %v202 = vsel %vm201, %v191, %v199
    %v203 = vand.u32 2147483647, %v202
    %vm204 = vcmp.le.f32.partialorder %v203, 0.7853982
    %vm205 = vcmp.lt.s32.totalorder %v202, 0
    %v206 = vand.u32 %v202, 2139095040
    %v207 = vshrl.u32 %v206, 23
    %v208 = vsub.s32 %v207, 127
    %v209 = vand.u32 2147483647, %v202
    %v210 = vand.u32 %v209, 8388607
    %v211 = vor.u32 %v210, 8388608
    %v212 = vsub.s32 0, %v211
    %v213 = vadd.s32 %v208, 1
    %vm214 = vcmp.gt.s32.totalorder %v213, 0
    %v215 = vsel %vm214, %v213, 0
    %v216 = vshrl.u32 %v215, 5
    %v217 = vand.u32 %v215, 31
    %v218 = vsub.s32 32, %v217
    %v219 = vshrl.u32 683565275, %v218
    %v220 = vshll.u32 683565275, %v217
    %v221 = vshrl.u32 2475754826, %v218
    %v222 = vor.u32 %v220, %v221
    %v223 = vshll.u32 2475754826, %v217
    %v224 = vshrl.u32 2131351028, %v218
    %v225 = vor.u32 %v223, %v224
    %v226 = vshll.u32 2131351028, %v217
    %v227 = vshrl.u32 2102212464, %v218
    %v228 = vor.u32 %v226, %v227
    %v229 = vshll.u32 2102212464, %v217
    %v230 = vshrl.u32 920167782, %v218
    %v231 = vor.u32 %v229, %v230
    %v232 = vshll.u32 920167782, %v217
    %v233 = vshrl.u32 1326507024, %v218
    %v234 = vor.u32 %v232, %v233
    %vm235 = vcmp.lt.s32.totalorder %v216, 1
    %vm236 = vcmp.lt.s32.totalorder %v216, 2
    %vm237 = vcmp.lt.s32.totalorder %v216, 3
    %vm238 = vcmp.lt.s32.totalorder %v216, 4
    %v239 = vsel %vm235, %v219, %v222
    %v240 = vsel %vm238, %v228, 2102212464
    %v241 = vsel %vm237, %v225, %v240
    %v242 = vsel %vm236, %v239, %v241
    %v243 = vsel %vm235, %v222, %v225
    %v244 = vsel %vm238, %v231, 920167782
    %v245 = vsel %vm237, %v228, %v244
    %v246 = vsel %vm236, %v243, %v245
    %v247 = vsel %vm235, %v225, %v228
    %v248 = vsel %vm238, %v234, 1326507024
    %v249 = vsel %vm237, %v231, %v248
    %v250 = vsel %vm236, %v247, %v249
    %v251 = vshll.u32 %v211, 8
    %v252 = vmul.u32.u64.compose %v251, %v250
    %v253 = vextract.low.u32 %v252
    %v254 = vextract.high.u32 %v252
    %v255 = vmul.u32.u64.compose %v251, %v246
    %v256 = vextract.low.u32 %v255
    %v257 = vextract.high.u32 %v255
    %v258 = vmul.u32 %v251, %v242
    %v259 = vadd.s32 %v254, %v256
    %vm260 = vc.u32 %v254, %v256
    %v261 = vadd.s32 %v257, 1
    %v262 = vsel %vm260, %v261, %v257
    %v263 = vadd.s32 %v258, %v262
    %v264 = vadd.s32 %v263, 536870912
    %v265 = vshrl.u32 %v264, 30
    %v266 = vshll.u32 %v265, 30
    %v267 = vsub.s32 %v263, %v266
    %vm268 = vcmp.lt.s32.totalorder %v267, 0
    %v269 = vsub.s32 0, %v267
    %v270 = vsel %vm268, %v269, %v267
    %v271 = vclz %v270
    %v272 = vsub.s32 %v271, 2
    %vm273 = vcmp.gt.s32.totalorder 0, %v272
    %v274 = vsel %vm273, 0, %v272
    %v275 = vsub.s32 32, %v274
    %v276 = vshll.u32 %v267, %v274
    %v277 = vshrl.u32 %v259, %v275
    %v278 = vor.u32 %v276, %v277
    %v279 = vsub.s32 4294967266, %v274
    %v280 = vadd.s32 %v279, 127
    %v281 = vshll.u32 %v280, 23
    %v282 = vor.u32 4788187, %v281
    %v283 = vand.u32 2147483647, %v282
    %v285 = vcvt.s32.f32 %v278
    %v286 = vmul.f32 %v285, %v283
    %v287 = vxor.u32 %v286, 2147483648
    %v288 = vsel %vm205, %v287, %v286
    %v289 = vsub.s32 4, %v265
    %v290 = vsel %vm205, %v289, %v265
    %v291 = vsel %vm204, %v202, %v288
    %v292 = vsel %vm204, 0, %v290
    %v293 = vcosq.f32.pop %v291
    %v294 = vsinq.f32.pop %v291
    %vm295 = vweird.f32 %v202
    %v296 = vand.u32 %v292, 3
    %vm297 = vcmp.lt.s32.totalorder %v296, 2
    %vm298 = vcmp.eq.s32.totalorder %v296, 0
    %v299 = vxor.u32 %v294, 2147483648
    %v300 = vsel %vm298, %v293, %v299
    %vm301 = vcmp.eq.s32.totalorder %v296, 2
    %v302 = vxor.u32 %v293, 2147483648
    %v303 = vsel %vm301, %v302, %v294
    %v304 = vsel %vm297, %v300, %v303
    %v305 = vsel %vm295, nan, %v304
    %v306 = vpack.c.bf16 %v305, %v305
    %v307 = vand.u32 2147483647, %v202
    %vm308 = vcmp.le.f32.partialorder %v307, 0.7853982
    %vm309 = vcmp.lt.s32.totalorder %v202, 0
    %v310 = vand.u32 %v202, 2139095040
    %v311 = vshrl.u32 %v310, 23
    %v312 = vsub.s32 %v311, 127
    %v313 = vand.u32 2147483647, %v202
    %v314 = vand.u32 %v313, 8388607
    %v315 = vor.u32 %v314, 8388608
    %v316 = vsub.s32 0, %v315
    %v317 = vadd.s32 %v312, 1
    %vm318 = vcmp.gt.s32.totalorder %v317, 0
    %v319 = vsel %vm318, %v317, 0
    %v320 = vshrl.u32 %v319, 5
    %v321 = vand.u32 %v319, 31
    %v322 = vsub.s32 32, %v321
    %v323 = vshrl.u32 683565275, %v322
    %v324 = vshll.u32 683565275, %v321
    %v325 = vshrl.u32 2475754826, %v322
    %v326 = vor.u32 %v324, %v325
    %v327 = vshll.u32 2475754826, %v321
    %v328 = vshrl.u32 2131351028, %v322
    %v329 = vor.u32 %v327, %v328
    %v330 = vshll.u32 2131351028, %v321
    %v331 = vshrl.u32 2102212464, %v322
    %v332 = vor.u32 %v330, %v331
    %v333 = vshll.u32 2102212464, %v321
    %v334 = vshrl.u32 920167782, %v322
    %v335 = vor.u32 %v333, %v334
    %v336 = vshll.u32 920167782, %v321
    %v337 = vshrl.u32 1326507024, %v322
    %v338 = vor.u32 %v336, %v337
    %vm339 = vcmp.lt.s32.totalorder %v320, 1
    %vm340 = vcmp.lt.s32.totalorder %v320, 2
    %vm341 = vcmp.lt.s32.totalorder %v320, 3
    %vm342 = vcmp.lt.s32.totalorder %v320, 4
    %v343 = vsel %vm339, %v323, %v326
    %v344 = vsel %vm342, %v332, 2102212464
    %v345 = vsel %vm341, %v329, %v344
    %v346 = vsel %vm340, %v343, %v345
    %v347 = vsel %vm339, %v326, %v329
    %v348 = vsel %vm342, %v335, 920167782
    %v349 = vsel %vm341, %v332, %v348
    %v350 = vsel %vm340, %v347, %v349
    %v351 = vsel %vm339, %v329, %v332
    %v352 = vsel %vm342, %v338, 1326507024
    %v353 = vsel %vm341, %v335, %v352
    %v354 = vsel %vm340, %v351, %v353
    %v355 = vshll.u32 %v315, 8
    %v356 = vmul.u32.u64.compose %v355, %v354
    %v357 = vextract.low.u32 %v356
    %v358 = vextract.high.u32 %v356
    %v359 = vmul.u32.u64.compose %v355, %v350
    %v360 = vextract.low.u32 %v359
    %v361 = vextract.high.u32 %v359
    %v362 = vmul.u32 %v355, %v346
    %v363 = vadd.s32 %v358, %v360
    %vm364 = vc.u32 %v358, %v360
    %v365 = vadd.s32 %v361, 1
    %v366 = vsel %vm364, %v365, %v361
    %v367 = vadd.s32 %v362, %v366
    %v368 = vadd.s32 %v367, 536870912
    %v369 = vshrl.u32 %v368, 30
    %v370 = vshll.u32 %v369, 30
    %v371 = vsub.s32 %v367, %v370
    %vm372 = vcmp.lt.s32.totalorder %v371, 0
    %v373 = vsub.s32 0, %v371
    %v374 = vsel %vm372, %v373, %v371
    %v375 = vclz %v374
    %v376 = vsub.s32 %v375, 2
    %vm377 = vcmp.gt.s32.totalorder 0, %v376
    %v378 = vsel %vm377, 0, %v376
    %v379 = vsub.s32 32, %v378
    %v380 = vshll.u32 %v371, %v378
    %v381 = vshrl.u32 %v363, %v379
    %v382 = vor.u32 %v380, %v381
    %v383 = vsub.s32 4294967266, %v378
    %v384 = vadd.s32 %v383, 127
    %v385 = vshll.u32 %v384, 23
    %v386 = vor.u32 4788187, %v385
    %v387 = vand.u32 2147483647, %v386
    %v389 = vcvt.s32.f32 %v382
    %v390 = vmul.f32 %v389, %v387
    %v391 = vxor.u32 %v390, 2147483648
    %v392 = vsel %vm309, %v391, %v390
    %v393 = vsub.s32 4, %v369
    %v394 = vsel %vm309, %v393, %v369
    %v395 = vsel %vm308, %v202, %v392
    %v396 = vsel %vm308, 0, %v394
    %v397 = vcosq.f32.pop %v395
    %v398 = vsinq.f32.pop %v395
    %vm399 = vweird.f32 %v202
    %v400 = vadd.s32 %v396, 3
    %v401 = vand.u32 %v400, 3
    %vm402 = vcmp.lt.s32.totalorder %v401, 2
    %vm403 = vcmp.eq.s32.totalorder %v401, 0
    %v404 = vxor.u32 %v398, 2147483648
    %v405 = vsel %vm403, %v397, %v404
    %vm406 = vcmp.eq.s32.totalorder %v401, 2
    %v407 = vxor.u32 %v397, 2147483648
    %v408 = vsel %vm406, %v407, %v398
    %v409 = vsel %vm402, %v405, %v408
    %v410 = vsel %vm399, nan, %v409
    %v411 = vpack.c.bf16 %v410, %v410
    %v412 = vld [vmem:[#allocation6] sm:$0xf]
    %v413 = vld [vmem:[#allocation6 + $0x4] sm:$0xf]
    %v414 = vld [vmem:[#allocation6 + $0x8] sm:$0xf]
    %v415 = vld [vmem:[#allocation6 + $0xc] sm:$0xf]
    %v416 = vld [vmem:[#allocation7] sm:$0xf]
    %v417 = vld [vmem:[#allocation7 + $0x4] sm:$0xf]
    %v418 = vld [vmem:[#allocation7 + $0x8] sm:$0xf]
    %v419 = vld [vmem:[#allocation7 + $0xc] sm:$0xf]
    %v424 = vunpack.c.l.b16 %v416
    %v425 = vunpack.c.l.b16 %v417
    %v426 = vunpack.c.l.b16 %v418
    %v427 = vunpack.c.l.b16 %v419
    %v428 = vpack.c.b16 %v425, %v424
    %v429 = vpack.c.b16 %v427, %v426
    %vm432 = vcmask 261120
    %v434 = vsel %vm432, %v411, 0
    %436 = vmatprep.subr.bf16.mxu0 0
    %437 = vmatpush1.bf16.msra.mxu0 0
    %438 = vmatprep.subr.bf16.mxu0 0
    %439 = vmatpush1.bf16.msra.mxu0 0
    %440 = vmatprep.subr.bf16.mxu0 0
    %441 = vmatpush1.bf16.msra.mxu0 0
    %442 = vmatprep.subr.bf16.mxu0 0
    %443 = vmatpush1.bf16.msra.mxu0 0
    %444 = vmatprep.subr.bf16.mxu0 0
    %445 = vmatpush1.bf16.msra.mxu0 0
    %446 = vmatprep.subr.bf16.mxu0 0
    %447 = vmatpush1.bf16.msra.mxu0 0
    %448 = vmatprep.subr.bf16.mxu0 0
    %449 = vmatpush1.bf16.msra.mxu0 %v429
    %450 = vmatprep.subr.bf16.mxu0 0
    %451 = vmatpush1.bf16.msra.mxu0 %v428
    %452 = vmatprep.subr.bf16.mxu0 0
    %453 = vmatpush2.bf16.msra.mxu0 0
    %454 = vmatprep.subr.bf16.mxu0 0
    %455 = vmatpush2.bf16.msra.mxu0 0
    %456 = vmatprep.subr.bf16.mxu0 0
    %457 = vmatpush2.bf16.msra.mxu0 0
    %458 = vmatprep.subr.bf16.mxu0 0
    %459 = vmatpush2.bf16.msra.mxu0 0
    %460 = vmatprep.subr.bf16.mxu0 0
    %461 = vmatpush2.bf16.msra.mxu0 0
    %462 = vmatprep.subr.bf16.mxu0 0
    %463 = vmatpush2.bf16.msra.mxu0 0
    %464 = vmatprep.subr.bf16.mxu0 0
    %465 = vmatpush2.bf16.msra.mxu0 0
    %466 = vmatprep.subr.bf16.mxu0 0
    %467 = vmatpush2.bf16.msra.mxu0 0
    %468 = vmatprep.mubr.bf16.mxu0 0
    %469 = vmatmul.mubr.bf16.gmra.mxu0 %v434
    %v470 = vpop.f32.mrf.mxu0
    %v471 = vadd.f32 0.0, %v470
    %v472 = vpop.f32.mrf.mxu0
    %v473 = vpop.f32.mrf.mxu0
    %v474 = vpop.f32.mrf.mxu0
    %475 = vdwg.mxu0
    %v480 = vunpack.c.l.b16 %v412
    %v481 = vunpack.c.l.b16 %v413
    %v482 = vunpack.c.l.b16 %v414
    %v483 = vunpack.c.l.b16 %v415
    %v484 = vpack.c.b16 %v481, %v480
    %v485 = vpack.c.b16 %v483, %v482
    %v489 = vsel %vm432, %v306, 0
    %491 = vmatprep.subr.bf16.mxu0 0
    %492 = vmatpush1.bf16.msra.mxu0 0
    %493 = vmatprep.subr.bf16.mxu0 0
    %494 = vmatpush1.bf16.msra.mxu0 0
    %495 = vmatprep.subr.bf16.mxu0 0
    %496 = vmatpush1.bf16.msra.mxu0 0
    %497 = vmatprep.subr.bf16.mxu0 0
    %498 = vmatpush1.bf16.msra.mxu0 0
    %499 = vmatprep.subr.bf16.mxu0 0
    %500 = vmatpush1.bf16.msra.mxu0 0
    %501 = vmatprep.subr.bf16.mxu0 0
    %502 = vmatpush1.bf16.msra.mxu0 0
    %503 = vmatprep.subr.bf16.mxu0 0
    %504 = vmatpush1.bf16.msra.mxu0 %v485
    %505 = vmatprep.subr.bf16.mxu0 0
    %506 = vmatpush1.bf16.msra.mxu0 %v484
    %507 = vmatprep.subr.bf16.mxu0 0
    %508 = vmatpush2.bf16.msra.mxu0 0
    %509 = vmatprep.subr.bf16.mxu0 0
    %510 = vmatpush2.bf16.msra.mxu0 0
    %511 = vmatprep.subr.bf16.mxu0 0
    %512 = vmatpush2.bf16.msra.mxu0 0
    %513 = vmatprep.subr.bf16.mxu0 0
    %514 = vmatpush2.bf16.msra.mxu0 0
    %515 = vmatprep.subr.bf16.mxu0 0
    %516 = vmatpush2.bf16.msra.mxu0 0
    %517 = vmatprep.subr.bf16.mxu0 0
    %518 = vmatpush2.bf16.msra.mxu0 0
    %519 = vmatprep.subr.bf16.mxu0 0
    %520 = vmatpush2.bf16.msra.mxu0 0
    %521 = vmatprep.subr.bf16.mxu0 0
    %522 = vmatpush2.bf16.msra.mxu0 0
    %523 = vmatprep.mubr.bf16.mxu0 0
    %524 = vmatmul.mubr.bf16.gmra.mxu0 %v489
    %v525 = vpop.f32.mrf.mxu0
    %v526 = vadd.f32 %v471, %v525
    %v527 = vpop.f32.mrf.mxu0
    %v528 = vpop.f32.mrf.mxu0
    %v529 = vpop.f32.mrf.mxu0
    %530 = vdwg.mxu0
    %v531 = vld [vmem:[%s9] sm:$0x1]
    %v533 = vlaneseq
    %v534 = vshrl.u32 %v533, 7
    %v535 = vsub.s32 0, %v534
    %v536 = vrot.slane %v531, %v535
    %v538 = vadd.f32 %v526, %v536
    %v539 = vxor.u32 %v538, 2147483648
    %v540 = vmul.f32 %v539, 1.442695
    %v541 = vpow.pop %v540
    %v542 = vadd.f32 %v541, 1.0
    %v543 = vrcp.pop %v542
    %v544 = vmul.f32 1.0, %v543
    %v545 = vmul.f32 %v538, %v544
    %v546 = vpack.c.bf16 %v545, %v545
    %v547 = vld [vmem:[#allocation9] sm:$0xf]
    %v548 = vld [vmem:[#allocation9 + $0x4] sm:$0xf]
    %v549 = vld [vmem:[#allocation9 + $0x8] sm:$0xf]
    %v550 = vld [vmem:[#allocation9 + $0xc] sm:$0xf]
    %v551 = vld [vmem:[#allocation9 + $0x10] sm:$0xf]
    %v552 = vld [vmem:[#allocation9 + $0x14] sm:$0xf]
    %v553 = vld [vmem:[#allocation9 + $0x18] sm:$0xf]
    %v554 = vld [vmem:[#allocation9 + $0x1c] sm:$0xf]
    %v555 = vld [vmem:[#allocation9 + $0x20] sm:$0xf]
    %v556 = vld [vmem:[#allocation9 + $0x24] sm:$0xf]
    %v557 = vld [vmem:[#allocation9 + $0x28] sm:$0xf]
    %v558 = vld [vmem:[#allocation9 + $0x2c] sm:$0xf]
    %v559 = vld [vmem:[#allocation9 + $0x30] sm:$0xf]
    %v560 = vld [vmem:[#allocation9 + $0x34] sm:$0xf]
    %v561 = vld [vmem:[#allocation9 + $0x38] sm:$0xf]
    %v562 = vld [vmem:[#allocation9 + $0x3c] sm:$0xf]
    %v563 = vld [vmem:[%s11] sm:$0x1]
    %v565 = vlaneseq
    %v566 = vshrl.u32 %v565, 7
    %v567 = vsub.s32 0, %v566
    %v568 = vrot.slane %v563, %v567
    %v586 = vunpack.c.l.b16 %v547
    %v587 = vunpack.c.l.b16 %v548
    %v588 = vunpack.c.l.b16 %v549
    %v589 = vunpack.c.l.b16 %v550
    %v590 = vunpack.c.l.b16 %v551
    %v591 = vunpack.c.l.b16 %v552
    %v592 = vunpack.c.l.b16 %v553
    %v593 = vunpack.c.l.b16 %v554
    %v594 = vunpack.c.l.b16 %v555
    %v595 = vunpack.c.l.b16 %v556
    %v596 = vunpack.c.l.b16 %v557
    %v597 = vunpack.c.l.b16 %v558
    %v598 = vunpack.c.l.b16 %v559
    %v599 = vunpack.c.l.b16 %v560
    %v600 = vunpack.c.l.b16 %v561
    %v601 = vunpack.c.l.b16 %v562
    %v602 = vpack.c.b16 %v587, %v586
    %v603 = vpack.c.b16 %v589, %v588
    %v604 = vpack.c.b16 %v591, %v590
    %v605 = vpack.c.b16 %v593, %v592
    %v606 = vpack.c.b16 %v595, %v594
    %v607 = vpack.c.b16 %v597, %v596
    %v608 = vpack.c.b16 %v599, %v598
    %v609 = vpack.c.b16 %v601, %v600
    %618 = vmatprep.subr.bf16.mxu0 0
    %619 = vmatpush1.bf16.msra.mxu0 %v609
    %620 = vmatprep.subr.bf16.mxu0 0
    %621 = vmatpush1.bf16.msra.mxu0 %v608
    %622 = vmatprep.subr.bf16.mxu0 0
    %623 = vmatpush1.bf16.msra.mxu0 %v607
    %624 = vmatprep.subr.bf16.mxu0 0
    %625 = vmatpush1.bf16.msra.mxu0 %v606
    %626 = vmatprep.subr.bf16.mxu0 0
    %627 = vmatpush1.bf16.msra.mxu0 %v605
    %628 = vmatprep.subr.bf16.mxu0 0
    %629 = vmatpush1.bf16.msra.mxu0 %v604
    %630 = vmatprep.subr.bf16.mxu0 0
    %631 = vmatpush1.bf16.msra.mxu0 %v603
    %632 = vmatprep.subr.bf16.mxu0 0
    %633 = vmatpush1.bf16.msra.mxu0 %v602
    %634 = vmatprep.subr.bf16.mxu0 0
    %635 = vmatpush2.bf16.msra.mxu0 0
    %636 = vmatprep.subr.bf16.mxu0 0
    %637 = vmatpush2.bf16.msra.mxu0 0
    %638 = vmatprep.subr.bf16.mxu0 0
    %639 = vmatpush2.bf16.msra.mxu0 0
    %640 = vmatprep.subr.bf16.mxu0 0
    %641 = vmatpush2.bf16.msra.mxu0 0
    %642 = vmatprep.subr.bf16.mxu0 0
    %643 = vmatpush2.bf16.msra.mxu0 0
    %644 = vmatprep.subr.bf16.mxu0 0
    %645 = vmatpush2.bf16.msra.mxu0 0
    %646 = vmatprep.subr.bf16.mxu0 0
    %647 = vmatpush2.bf16.msra.mxu0 0
    %648 = vmatprep.subr.bf16.mxu0 0
    %649 = vmatpush2.bf16.msra.mxu0 0
    %650 = vmatprep.mubr.bf16.mxu0 0
    %651 = vmatmul.mubr.bf16.gmra.mxu0 %v546
    %v652 = vpop.f32.mrf.mxu0
    %v653 = vadd.f32 %v568, %v652
    %v654 = vpop.f32.mrf.mxu0
    %v655 = vpop.f32.mrf.mxu0
    %v656 = vpop.f32.mrf.mxu0
    %657 = vdwg.mxu0
    %v658 = vld [vmem:[%s3] sm:$0x3]
    %v659 = vadd.f32 %v653, %v658
    %660 = vst [vmem:[#allocation13] sm:$0x3] %v659
    %v661 = vld [vmem:[%s2] sm:$0xff]
    %v662 = vld [vmem:[%s2 + $0x8] sm:$0xff]
    %v663 = vld [vmem:[%s2 + $0x10] sm:$0xff]
    %v664 = vld [vmem:[%s2 + $0x18] sm:$0xff]
    %v665 = vpack.c.bf16 %v662, %v661
    %v666 = vpack.c.bf16 %v664, %v663
    %v667 = vld [vmem:[%s12] sm:$0xf]
    %v668 = vld [vmem:[%s12 + $0x4] sm:$0xf]
    %v669 = vld [vmem:[%s12 + $0x8] sm:$0xf]
    %v670 = vld [vmem:[%s12 + $0xc] sm:$0xf]
    %v671 = vld [vmem:[%s12 + $0x10] sm:$0xf]
    %v672 = vld [vmem:[%s12 + $0x14] sm:$0xf]
    %v673 = vld [vmem:[%s12 + $0x18] sm:$0xf]
    %v674 = vld [vmem:[%s12 + $0x1c] sm:$0xf]
    %v675 = vld [vmem:[%s12 + $0x20] sm:$0xf]
    %v676 = vld [vmem:[%s12 + $0x24] sm:$0xf]
    %v677 = vld [vmem:[%s12 + $0x28] sm:$0xf]
    %v678 = vld [vmem:[%s12 + $0x2c] sm:$0xf]
    %v679 = vld [vmem:[%s12 + $0x30] sm:$0xf]
    %v680 = vld [vmem:[%s12 + $0x34] sm:$0xf]
    %v681 = vld [vmem:[%s12 + $0x38] sm:$0xf]
    %v682 = vld [vmem:[%s12 + $0x3c] sm:$0xf]
    %v683 = vld [vmem:[%s13] sm:$0x1]
    %v685 = vlaneseq
    %v686 = vshrl.u32 %v685, 7
    %v687 = vsub.s32 0, %v686
    %v688 = vrot.slane %v683, %v687
    %v706 = vunpack.c.l.b16 %v667
    %v707 = vunpack.c.l.b16 %v668
    %v708 = vunpack.c.l.b16 %v669
    %v709 = vunpack.c.l.b16 %v670
    %v710 = vunpack.c.l.b16 %v671
    %v711 = vunpack.c.l.b16 %v672
    %v712 = vunpack.c.l.b16 %v673
    %v713 = vunpack.c.l.b16 %v674
    %v714 = vunpack.c.l.b16 %v675
    %v715 = vunpack.c.l.b16 %v676
    %v716 = vunpack.c.l.b16 %v677
    %v717 = vunpack.c.l.b16 %v678
    %v718 = vunpack.c.l.b16 %v679
    %v719 = vunpack.c.l.b16 %v680
    %v720 = vunpack.c.l.b16 %v681
    %v721 = vunpack.c.l.b16 %v682
    %v722 = vpack.c.b16 %v707, %v706
    %v723 = vpack.c.b16 %v709, %v708
    %v724 = vpack.c.b16 %v711, %v710
    %v725 = vpack.c.b16 %v713, %v712
    %v726 = vpack.c.b16 %v715, %v714
    %v727 = vpack.c.b16 %v717, %v716
    %v728 = vpack.c.b16 %v719, %v718
    %v729 = vpack.c.b16 %v721, %v720
    %738 = vmatprep.subr.bf16.mxu0 0
    %739 = vmatpush1.bf16.msra.mxu0 %v729
    %740 = vmatprep.subr.bf16.mxu0 0
    %741 = vmatpush1.bf16.msra.mxu0 %v728
    %742 = vmatprep.subr.bf16.mxu0 0
    %743 = vmatpush1.bf16.msra.mxu0 %v727
    %744 = vmatprep.subr.bf16.mxu0 0
    %745 = vmatpush1.bf16.msra.mxu0 %v726
    %746 = vmatprep.subr.bf16.mxu0 0
    %747 = vmatpush1.bf16.msra.mxu0 %v725
    %748 = vmatprep.subr.bf16.mxu0 0
    %749 = vmatpush1.bf16.msra.mxu0 %v724
    %750 = vmatprep.subr.bf16.mxu0 0
    %751 = vmatpush1.bf16.msra.mxu0 %v723
    %752 = vmatprep.subr.bf16.mxu0 0
    %753 = vmatpush1.bf16.msra.mxu0 %v722
    %754 = vmatprep.subr.bf16.mxu0 0
    %755 = vmatpush2.bf16.msra.mxu0 0
    %756 = vmatprep.subr.bf16.mxu0 0
    %757 = vmatpush2.bf16.msra.mxu0 0
    %758 = vmatprep.subr.bf16.mxu0 0
    %759 = vmatpush2.bf16.msra.mxu0 0
    %760 = vmatprep.subr.bf16.mxu0 0
    %761 = vmatpush2.bf16.msra.mxu0 0
    %762 = vmatprep.subr.bf16.mxu0 0
    %763 = vmatpush2.bf16.msra.mxu0 0
    %764 = vmatprep.subr.bf16.mxu0 0
    %765 = vmatpush2.bf16.msra.mxu0 0
    %766 = vmatprep.subr.bf16.mxu0 0
    %767 = vmatpush2.bf16.msra.mxu0 0
    %768 = vmatprep.subr.bf16.mxu0 0
    %769 = vmatpush2.bf16.msra.mxu0 0
    %770 = vmatprep.mubr.bf16.mxu0 0
    %771 = vmatmul.mubr.bf16.gmra.mxu0 %v665
    %v772 = vpop.f32.mrf.mxu0
    %v773 = vadd.f32 %v688, %v772
    %v774 = vpop.f32.mrf.mxu0
    %v775 = vpop.f32.mrf.mxu0
    %v776 = vadd.f32 %v688, %v775
    %v777 = vpop.f32.mrf.mxu0
    %778 = vmatprep.mubr.bf16.mxu0 0
    %779 = vmatmul.mubr.bf16.gmra.mxu0 %v666
    %v780 = vpop.f32.mrf.mxu0
    %v781 = vadd.f32 %v688, %v780
    %v782 = vpop.f32.mrf.mxu0
    %v783 = vpop.f32.mrf.mxu0
    %v784 = vadd.f32 %v688, %v783
    %v785 = vpop.f32.mrf.mxu0
    %786 = vdwg.mxu0
    %787 = vst [vmem:[#allocation10] sm:$0xff] %v773
    %788 = vst [vmem:[#allocation10 + $0x8] sm:$0xff] %v776
    %789 = vst [vmem:[#allocation10 + $0x10] sm:$0xff] %v781
    %790 = vst [vmem:[#allocation10 + $0x18] sm:$0xff] %v784
    // Predicated region
    $region74: #{_forward_impl.1} parent=1 // pred_check
      _
    $region75: #{_forward_impl.1} parent=1 // pred_check_branch
      %792 = sbr.rel (0) target = $region77
    $region76: #{_forward_impl.1} parent=1 // pred_region
      %s794 = ssub.s32 512, 512
      %795 = vsyncadd [#allocation4], %s794
      %s796 = sshll.u32 [#allocation10], 4
      %s797 = int_to_ptr.vmem [resolvable:$true] %s796
      %802 = dma.vmem_to_hbm [thread:$0]  %s797, 512, %s14, [#allocation4], 128, 128, 8
    $region77: #{_forward_impl.1} parent=1 // pred_fallthru
      _
    // Predicated region
    $region78: #{_forward_impl.1} parent=1 // pred_check
      _
    $region79: #{_forward_impl.1} parent=1 // pred_check_branch
      %804 = sbr.rel (0) target = $region81
    $region80: #{_forward_impl.1} parent=1 // pred_region
      %s806 = ssub.s32 512, 512
      %807 = vsyncadd [#allocation12], %s806
      %s808 = sshll.u32 [#allocation11], 4
      %s809 = int_to_ptr.vmem [resolvable:$true] %s808
      %814 = dma.vmem_to_hbm [thread:$0]  %s809, 512, %s15, [#allocation12], 128, 128, 8
    $region81: #{_forward_impl.1} parent=1 // pred_fallthru
      _
    // Predicated region
    $region82: #{_forward_impl.1} parent=1 // pred_check
      _
    $region83: #{_forward_impl.1} parent=1 // pred_check_branch
      %816 = sbr.rel (0) target = $region85
    $region84: #{_forward_impl.1} parent=1 // pred_region
      %s818 = ssub.s32 32, 32
      %819 = vsyncadd [#allocation12], %s818
      %s821 = sshll.u32 [#allocation13], 4
      %s822 = int_to_ptr.vmem [resolvable:$true] %s821
      %824 = dma.vmem_to_hbm [thread:$0]  %s822, 32, %s16, [#allocation12]
    $region85: #{_forward_impl.1} parent=1 // pred_fallthru
      _
    // Predicated region
    $region86: #{_forward_impl.1} parent=1 // pred_check
      _
    $region87: #{_forward_impl.1} parent=1 // pred_check_branch
      %826 = sbr.rel (0) target = $region89
    $region88: #{_forward_impl.1} parent=1 // pred_region
      %827 = dma.done [#allocation4], 512
    $region89: #{_forward_impl.1} parent=1 // pred_fallthru
      _
    // Predicated region
    $region90: #{_forward_impl.1} parent=1 // pred_check
      _
    $region91: #{_forward_impl.1} parent=1 // pred_check_branch
      %829 = sbr.rel (0) target = $region93
    $region92: #{_forward_impl.1} parent=1 // pred_region
      %830 = dma.done [#allocation12], 512
    $region93: #{_forward_impl.1} parent=1 // pred_fallthru
      _
    // Predicated region
    $region94: #{_forward_impl.1} parent=1 // pred_check
      _
    $region95: #{_forward_impl.1} parent=1 // pred_check_branch
      %832 = sbr.rel (0) target = $region97
    $region96: #{_forward_impl.1} parent=1 // pred_region
      %833 = dma.done [#allocation12], 32
    $region97: #{_forward_impl.1} parent=1 // pred_fallthru
      _
    %834 = vsyncpa [#allocation3], 1
    %835 = vsyncpa [#allocation8], 1
    %836 = vsyncpa [#allocation4], 1
    %837 = vsyncpa [#allocation12], 1
    %838 = vsyncpa [#allocation5], 1

</llo_original>
